<compile_context>
chip_gen: v6e
topology: v6e:2x2x1
jax: 0.10.0
libtpu: 0.0.40
codegen_flags: <defaults>
</compile_context>

<pallas_src>
import jax
import jax.numpy as jnp
from jax.experimental import pallas as pl
from jax.experimental.pallas import tpu as pltpu

HIDDEN = 768


def _linear_kernel(x_ref, w_ref, b_ref, o_ref):
    # x_ref: (TM, 768) input dtype; w_ref: (768, TN) bf16 [in, out];
    # b_ref: (1, TN) f32; o_ref: (TM, TN) input dtype.
    x = x_ref[...].astype(w_ref.dtype)  # VPU cast in VMEM; no-op for bf16 inputs
    acc = jnp.dot(x, w_ref[...], preferred_element_type=jnp.float32)
    o_ref[...] = (acc + b_ref[...]).astype(o_ref.dtype)


def prepare_linear_params(weight, bias, compute_dtype=jnp.bfloat16):
    """One-time (init-time) prep: PyTorch [out, in] -> [in, out], cast the
    weight to the MXU compute dtype, keep the bias in f32 for the f32 add."""
    w_t = jnp.asarray(weight).T.astype(compute_dtype)            # (in, out)
    b2d = jnp.asarray(bias).astype(jnp.float32).reshape(1, HIDDEN)
    return w_t, b2d


def single_linear(x, w_t, b2d, *, tm=512, tn=384):
    """x: (..., 768); w_t: (768, 768) [in, out] (bf16); b2d: (1, 768) f32."""
    assert HIDDEN % tn == 0 and tn % 128 == 0
    orig_shape = x.shape
    x2d = x.reshape(-1, HIDDEN)
    M = x2d.shape[0]

    # M tile: large tiles amortize per-step overhead; shrink for tiny M
    # (multiple of 16 covers bf16/f32 sublane packing).
    TM = tm if M >= tm else max(16, ((M + 15) // 16) * 16)
    grid_m = pl.cdiv(M, TM)       # last block may be ragged; OOB writes dropped
    grid_n = HIDDEN // tn         # 2 halves of the output dim

    x_item = jnp.dtype(x2d.dtype).itemsize
    w_item = jnp.dtype(w_t.dtype).itemsize
    cost = pl.CostEstimate(
        flops=2 * M * HIDDEN * HIDDEN,
        transcendentals=0,
        bytes_accessed=(M * HIDDEN * x_item * grid_n       # x re-streamed per N half
                        + HIDDEN * HIDDEN * w_item         # weight once per call
                        + HIDDEN * 4                       # bias
                        + M * HIDDEN * x_item),            # output
    )

    out = pl.pallas_call(
        _linear_kernel,
        out_shape=jax.ShapeDtypeStruct((M, HIDDEN), x.dtype),
        grid_spec=pltpu.PrefetchScalarGridSpec(
            num_scalar_prefetch=0,
            grid=(grid_n, grid_m),            # N outermost, M innermost
            in_specs=[
                # Activation tiles stream over M (auto double-buffered).
                pl.BlockSpec((TM, HIDDEN), lambda j, i: (i, 0)),
                # Weight half: constant across the inner M sweep -> stays
                # VMEM-resident for that sweep; split over N for v7x dual-core.
                pl.BlockSpec((HIDDEN, tn), lambda j, i: (0, j)),
                pl.BlockSpec((1, tn), lambda j, i: (0, j)),
            ],
            out_specs=pl.BlockSpec((TM, tn), lambda j, i: (i, j)),
        ),
        compiler_params=pltpu.CompilerParams(
            dimension_semantics=("parallel", "parallel")),
        cost_estimate=cost,
    )(x2d, w_t, b2d)

    return out.reshape(orig_shape)


if __name__ == "__main__":
    key = jax.random.PRNGKey(0)
    k_x, k_w, k_b = jax.random.split(key, 3)

    # Small shapes consistent with the module: batch=2, seq=8, hidden=768.
    batch, seq = 2, 8
    x = jax.random.normal(k_x, (batch, seq, HIDDEN), dtype=jnp.float32)

    # PyTorch nn.Linear-style init: uniform(-1/sqrt(in), 1/sqrt(in)).
    bound = 1.0 / (HIDDEN ** 0.5)
    weight = jax.random.uniform(k_w, (HIDDEN, HIDDEN), jnp.float32, -bound, bound)  # [out, in]
    bias = jax.random.uniform(k_b, (HIDDEN,), jnp.float32, -bound, bound)

    # One-time init-time weight prep (transpose + bf16 cast).
    w_t, b2d = prepare_linear_params(weight, bias)

    y = single_linear(x, w_t, b2d)
    jax.block_until_ready(y)

    # Sanity check against plain-JAX reference (bf16 operands, f32 accumulate
    # -> ~1e-3 abs error at these magnitudes).
    y_ref = x @ weight.T + bias
    assert y.shape == (batch, seq, HIDDEN)
    assert y.dtype == x.dtype
    assert jnp.allclose(y, y_ref, atol=2e-2, rtol=2e-2)

    # Tiled + ragged path: M = 600 -> TM = 512, grid_m = 2, last block ragged.
    x_big = jax.random.normal(k_x, (3, 200, HIDDEN), dtype=jnp.float32)
    y_big = single_linear(x_big, w_t, b2d)
    jax.block_until_ready(y_big)
    y_big_ref = x_big @ weight.T + bias
    assert jnp.allclose(y_big, y_big_ref, atol=2e-2, rtol=2e-2)

    print("KERNEL_OK")
</pallas_src>

<mosaic_0001>
module attributes {stable_mosaic.version = 11 : i64} {
  func.func @_linear_kernel(%arg0: i32, %arg1: i32, %arg2: memref<16x768xf32, #tpu.memory_space<vmem>>, %arg3: memref<768x384xbf16, #tpu.memory_space<vmem>>, %arg4: memref<1x384xf32, #tpu.memory_space<vmem>>, %arg5: memref<16x384xf32, #tpu.memory_space<vmem>>) attributes {dimension_semantics = [#tpu.dimension_semantics<parallel>, #tpu.dimension_semantics<parallel>], iteration_bounds = array<i64: 2, 1>, scalar_prefetch = 0 : i64, scratch_operands = 0 : i64, tpu.core_type = #tpu.core_type<tc>, window_params = [{transform_indices = @transform_0, window_bounds = array<i64: 16, 768>}, {transform_indices = @transform_1, window_bounds = array<i64: 768, 384>}, {transform_indices = @transform_2, window_bounds = array<i64: 1, 384>}, {transform_indices = @transform_3, window_bounds = array<i64: 16, 384>}]} {
    %c0 = arith.constant 0 : index
    %c0_0 = arith.constant 0 : index
    %0 = vector.load %arg2[%c0, %c0_0] : memref<16x768xf32, #tpu.memory_space<vmem>>, vector<16x768xf32>
    %1 = arith.truncf %0 : vector<16x768xf32> to vector<16x768xbf16>
    %c0_1 = arith.constant 0 : index
    %c0_2 = arith.constant 0 : index
    %2 = vector.load %arg3[%c0_1, %c0_2] : memref<768x384xbf16, #tpu.memory_space<vmem>>, vector<768x384xbf16>
    %cst = arith.constant dense<0.000000e+00> : vector<16x384xf32>
    %3 = tpu.matmul %1, %2, %cst {dimension_numbers = #tpu.dot_dimension_numbers<[1], [0], [0], [1], [0, 0, 1, 1], [], []>} : vector<16x768xbf16>, vector<768x384xbf16>, vector<16x384xf32> -> vector<16x384xf32>
    %c0_3 = arith.constant 0 : index
    %c0_4 = arith.constant 0 : index
    %4 = vector.load %arg4[%c0_3, %c0_4] : memref<1x384xf32, #tpu.memory_space<vmem>>, vector<1x384xf32>
    %5 = vector.broadcast %4 : vector<1x384xf32> to vector<16x384xf32>
    %6 = arith.addf %3, %5 : vector<16x384xf32>
    %c0_5 = arith.constant 0 : index
    %c0_6 = arith.constant 0 : index
    %7 = vector.load %arg5[%c0_5, %c0_6] : memref<16x384xf32, #tpu.memory_space<vmem>>, vector<16x384xf32>
    tpu.vector_store %arg5[%c0_5, %c0_6], %6 {strides = array<i32>} : memref<16x384xf32, #tpu.memory_space<vmem>>, vector<16x384xf32>,
    return
  }
  func.func @transform_0(%arg0: i32, %arg1: i32) -> (i32, i32) {
    %c0_i32 = arith.constant 0 : i32
    %c0_i32_0 = arith.constant 0 : i32
    return %arg1, %c0_i32 : i32, i32
  }
  func.func @transform_1(%arg0: i32, %arg1: i32) -> (i32, i32) {
    %c0_i32 = arith.constant 0 : i32
    %c0_i32_0 = arith.constant 0 : i32
    return %c0_i32, %arg0 : i32, i32
  }
  func.func @transform_2(%arg0: i32, %arg1: i32) -> (i32, i32) {
    %c0_i32 = arith.constant 0 : i32
    %c0_i32_0 = arith.constant 0 : i32
    return %c0_i32, %arg0 : i32, i32
  }
  func.func @transform_3(%arg0: i32, %arg1: i32) -> (i32, i32) {
    %c0_i32 = arith.constant 0 : i32
    return %arg1, %arg0 : i32, i32
  }
}

</mosaic_0001>

<llo_original>
// kernel: tpu_custom_call.1
$region0: #{tpu_custom_call.1}
  #allocation0 [shape = 'u32[]', space=smem, size = 0x4, offset = 0x4, fixed_abs, tag = 'smem constant byte address 0x4 - core index']
  #allocation1 [shape = 'u32[144,128]{1,0:T(1,128)}', space=vmem, size = 0x12000, scoped, tag = 'internal scratch']
  %s0 = inlined_call_operand.hbm [shape: f32[16,768], index: 0, kind: input, shape index: {}]
  %s1 = inlined_call_operand.hbm [shape: bf16[768,768], index: 1, kind: input, shape index: {}]
  %s2 = inlined_call_operand.hbm [shape: f32[1,768], index: 2, kind: input, shape index: {}]
  %s3 = inlined_call_operand.hbm [shape: f32[16,768], index: 3, kind: output, shape index: {}]
  %s4 = sld [smem:[#allocation0]]
  $region57: #{tpu_custom_call.1} parent=0
    _
  %s6 = ssub.s32 1, %s4
  %s7 = scalar_select 0, %s6, %s4
  $region1: #{tpu_custom_call.1} parent=0
    #allocation2 [shape = 'u8[49152]{0}', space=vmem, size = 0xc000, scoped, tag = 'input window, operand 0, single buffered']
    #allocation3 [shape = 's32[2]{0}', space=sflag, size = 0x8, scoped, tag = 'scoped memory for tpu_custom_call.1']
    #allocation4 [shape = 's32[2]{0}', space=sflag, size = 0x8, scoped, tag = 'scoped memory for tpu_custom_call.1']
    #allocation5 [shape = 'u8[1179648]{0}', space=vmem, size = 0x120000, scoped, tag = 'input window, operand 1']
    #allocation6 [shape = 's32[2]{0}', space=sflag, size = 0x8, scoped, tag = 'scoped memory for tpu_custom_call.1']
    #allocation7 [shape = 'u8[3072]{0}', space=vmem, size = 0xc00, scoped, tag = 'input window, operand 2']
    #allocation8 [shape = 'u8[49152]{0}', space=vmem, size = 0xc000, scoped, tag = 'output window, operand 0']
    %8 = vsyncpa [#allocation3], 0
    %9 = vsyncpa [#allocation6], 0
    %s10 = scalar_lea.sflag [#allocation6], 1
    %11 = vsyncpa %s10, 0
    %12 = vsyncpa [#allocation4], 0
    %s13 = scalar_lea.sflag [#allocation4], 1
    %14 = vsyncpa %s13, 0
    loop: start=0, step=1, limit=4
    $region2: #{tpu_custom_call.1} parent=1 // loop_pre_header
      _
    $region3: #{tpu_custom_call.1} parent=1 // loop_header
      %s16 = sphi 0, %s20
      %p17 = scmp.ge.s32.totalorder %s16, 4
      %s23 = sphi 0, %s35
      %s24 = sphi 0, %s31
      %s25 = sphi 0, %s23
      %s26 = sphi 0, %s24
      %s27 = sphi 0, %s25
      %s28 = sphi 0, %s26
      %s38 = sphi 0, %s40
      %s41 = sphi 0, %s38
      %s42 = sphi 0, %s41
      %s58 = sphi 0, %s42
      %s64 = sphi 0, %s66
      %s67 = sphi 0, %s64
      %s68 = sphi 0, %s67
      %s84 = sphi 0, %s68
      %s90 = sphi 0, %s92
      %s93 = sphi 0, %s90
      %s94 = sphi 0, %s93
      %s110 = sphi 0, %s94
      %s118 = sphi 0, %s120
      %s121 = sphi 0, %s118
      %s122 = sphi 0, %s121
      %s138 = sphi 0, %s122
    $region4: #{tpu_custom_call.1} parent=1 // loop_header_branch
      %19 = sbr.rel (%p17) target = $region8
    $region5: #{tpu_custom_call.1} parent=1 // loop_body
      %s21 = ssub.s32 %s16, 1
      %s22 = ssub.s32 %s16, 2
      %s29 = sadd.s32 1, %s24
      %p30 = scmp.ge.s32.totalorder %s29, 1
      %s31 = scalar_select %p30, 0, %s29
      %s32 = sadd.s32 1, %s23
      %s33 = scalar_select %p30, %s32, %s23
      %p34 = scmp.ge.s32.totalorder %s33, 2
      %s35 = scalar_select %p34, 0, %s33
      %s36 = ssub.s32 %s24, %s31
      %p37 = scmp.eq.s32.totalorder %s36, 0
      %s39 = sadd.s32 %s38, 1
      %s40 = scalar_select %p37, %s38, %s39
      %p43 = pneg %p37
      %p44 = scmp.eq.s32.totalorder %s16, 1
      %p45 = por %p43, %p44
      %p46 = scmp.ne.s32.totalorder %s38, %s41
      %p47 = scmp.eq.s32.totalorder %s16, 0
      %p48 = por %p46, %p47
      %p49 = scmp.ne.s32.totalorder %s38, %s41
      %p50 = scmp.eq.s32.totalorder %s21, 1
      %p51 = por %p49, %p50
      %p52 = scmp.ne.s32.totalorder %s41, %s42
      %p53 = scmp.eq.s32.totalorder %s21, 0
      %p54 = por %p52, %p53
      %p55 = scmp.ne.s32.totalorder %s41, %s42
      %p56 = scmp.eq.s32.totalorder %s22, 1
      %p57 = por %p55, %p56
      %p59 = scmp.ne.s32.totalorder %s42, %s58
      %p60 = scmp.eq.s32.totalorder %s22, 0
      %p61 = por %p59, %p60
      %s62 = ssub.s32 %s23, %s35
      %p63 = scmp.eq.s32.totalorder %s62, 0
      %s65 = sadd.s32 %s64, 1
      %s66 = scalar_select %p63, %s64, %s65
      %p69 = pneg %p63
      %p70 = scmp.eq.s32.totalorder %s16, 1
      %p71 = por %p69, %p70
      %p72 = scmp.ne.s32.totalorder %s64, %s67
      %p73 = scmp.eq.s32.totalorder %s16, 0
      %p74 = por %p72, %p73
      %p75 = scmp.ne.s32.totalorder %s64, %s67
      %p76 = scmp.eq.s32.totalorder %s21, 1
      %p77 = por %p75, %p76
      %p78 = scmp.ne.s32.totalorder %s67, %s68
      %p79 = scmp.eq.s32.totalorder %s21, 0
      %p80 = por %p78, %p79
      %p81 = scmp.ne.s32.totalorder %s67, %s68
      %p82 = scmp.eq.s32.totalorder %s22, 1
      %p83 = por %p81, %p82
      %p85 = scmp.ne.s32.totalorder %s68, %s84
      %p86 = scmp.eq.s32.totalorder %s22, 0
      %p87 = por %p85, %p86
      %s88 = ssub.s32 %s23, %s35
      %p89 = scmp.eq.s32.totalorder %s88, 0
      %s91 = sadd.s32 %s90, 1
      %s92 = scalar_select %p89, %s90, %s91
      %p95 = pneg %p89
      %p96 = scmp.eq.s32.totalorder %s16, 1
      %p97 = por %p95, %p96
      %p98 = scmp.ne.s32.totalorder %s90, %s93
      %p99 = scmp.eq.s32.totalorder %s16, 0
      %p100 = por %p98, %p99
      %p101 = scmp.ne.s32.totalorder %s90, %s93
      %p102 = scmp.eq.s32.totalorder %s21, 1
      %p103 = por %p101, %p102
      %p104 = scmp.ne.s32.totalorder %s93, %s94
      %p105 = scmp.eq.s32.totalorder %s21, 0
      %p106 = por %p104, %p105
      %p107 = scmp.ne.s32.totalorder %s93, %s94
      %p108 = scmp.eq.s32.totalorder %s22, 1
      %p109 = por %p107, %p108
      %p111 = scmp.ne.s32.totalorder %s94, %s110
      %p112 = scmp.eq.s32.totalorder %s22, 0
      %p113 = por %p111, %p112
      %s114 = ssub.s32 %s24, %s31
      %s115 = ssub.s32 %s23, %s35
      %s116 = sor.u32 %s114, %s115
      %p117 = scmp.eq.s32.totalorder %s116, 0
      %s119 = sadd.s32 %s118, 1
      %s120 = scalar_select %p117, %s118, %s119
      %p123 = pneg %p117
      %p124 = scmp.eq.s32.totalorder %s16, 1
      %p125 = por %p123, %p124
      %p126 = scmp.ne.s32.totalorder %s118, %s121
      %p127 = scmp.eq.s32.totalorder %s16, 0
      %p128 = por %p126, %p127
      %p129 = scmp.ne.s32.totalorder %s118, %s121
      %p130 = scmp.eq.s32.totalorder %s21, 1
      %p131 = por %p129, %p130
      %p132 = scmp.ne.s32.totalorder %s121, %s122
      %p133 = scmp.eq.s32.totalorder %s21, 0
      %p134 = por %p132, %p133
      %p135 = scmp.ne.s32.totalorder %s121, %s122
      %p136 = scmp.eq.s32.totalorder %s22, 1
      %p137 = por %p135, %p136
      %p139 = scmp.ne.s32.totalorder %s122, %s138
      %p140 = scmp.eq.s32.totalorder %s22, 0
      %p141 = por %p139, %p140
      %p142 = scmp.le.s32.totalorder 1, %s16
      %p143 = scmp.lt.s32.totalorder %s16, 3
      %p144 = pnand %p142, %p143
      %p145 = pneg %p144
      // Predicated region
      $region9: #{tpu_custom_call.1} parent=5 // pred_check
        _
      $region10: #{tpu_custom_call.1} parent=5 // pred_check_branch
        %147 = sbr.rel (%p144) target = $region12
      $region11: #{tpu_custom_call.1} parent=5 // pred_region
        %s148 = ssub.s32 %s16, 1
        // Predicated region
        $region13: #{tpu_custom_call.1} parent=11 // pred_check
          %p149 = pneg %p54
        $region14: #{tpu_custom_call.1} parent=11 // pred_check_branch
          %151 = sbr.rel (%p149) target = $region16
        $region15: #{tpu_custom_call.1} parent=11 // pred_region
          %s152 = smul.u32 2, %s26
          %s154 = ssub.s32 1536, 1536
          %155 = vsyncadd [#allocation3], %s154
          %s156 = smul.addr %s152, 6
          %s157 = smul.addr %s156, 128
          %s158 = scalar_lea.hbm %s0, %s157
          %s159 = sshll.u32 [#allocation2], 4
          %s160 = int_to_ptr.vmem [resolvable:$true] %s159
          %165 = dma.hbm_to_vmem [thread:$0]  %s158, 1536, %s160, [#allocation3], 768, 768, 48
        $region16: #{tpu_custom_call.1} parent=11 // pred_fallthru
          _
      $region12: #{tpu_custom_call.1} parent=5 // pred_fallthru
        _
      %p166 = scmp.lt.s32.totalorder %s16, 2
      // Predicated region
      $region17: #{tpu_custom_call.1} parent=5 // pred_check
        %p167 = pneg %p166
      $region18: #{tpu_custom_call.1} parent=5 // pred_check_branch
        %169 = sbr.rel (%p167) target = $region20
      $region19: #{tpu_custom_call.1} parent=5 // pred_region
        // Predicated region
        $region21: #{tpu_custom_call.1} parent=19 // pred_check
          %p170 = pneg %p74
        $region22: #{tpu_custom_call.1} parent=19 // pred_check_branch
          %172 = sbr.rel (%p170) target = $region24
        $region23: #{tpu_custom_call.1} parent=19 // pred_region
          %s173 = sand.u32 %s16, 1
          %s174 = scalar_lea.sflag [#allocation6], %s173
          %s175 = sand.u32 %s64, 1
          %s176 = smul.addr %s175, 1152
          %s177 = scalar_lea.vmem [#allocation5], %s176
          %s178 = smul.u32 3, %s23
          %s180 = ssub.s32 18432, 18432
          %181 = vsyncadd %s174, %s180
          %s182 = smul.addr %s178, 64
          %s183 = scalar_lea.hbm %s1, %s182
          %s184 = sshll.u32 %s177, 4
          %s185 = int_to_ptr.vmem [resolvable:$true] %s184
          %190 = dma.hbm_to_vmem [thread:$0]  %s183, 18432, %s185, %s174, 384, 192, 12
        $region24: #{tpu_custom_call.1} parent=19 // pred_fallthru
          _
        // Predicated region
        $region25: #{tpu_custom_call.1} parent=19 // pred_check
          %p191 = pneg %p100
        $region26: #{tpu_custom_call.1} parent=19 // pred_check_branch
          %193 = sbr.rel (%p191) target = $region28
        $region27: #{tpu_custom_call.1} parent=19 // pred_region
          %s194 = sand.u32 %s16, 1
          %s195 = scalar_lea.sflag [#allocation6], %s194
          %s196 = sand.u32 %s90, 1
          %s197 = smul.addr %s196, 3
          %s198 = scalar_lea.vmem [#allocation7], %s197
          %s199 = smul.u32 3, %s23
          %s201 = ssub.s32 48, 48
          %202 = vsyncadd %s195, %s201
          %s203 = smul.addr %s199, 16
          %s204 = scalar_lea.hbm %s2, %s203
          %s206 = sshll.u32 %s198, 4
          %s207 = int_to_ptr.vmem [resolvable:$true] %s206
          %209 = dma.hbm_to_vmem [thread:$0]  %s204, 48, %s207, %s195
        $region28: #{tpu_custom_call.1} parent=19 // pred_fallthru
          _
      $region20: #{tpu_custom_call.1} parent=5 // pred_fallthru
        _
      %p210 = scmp.le.s32.totalorder 1, %s16
      %p211 = scmp.lt.s32.totalorder %s16, 3
      %p212 = pnand %p210, %p211
      %p213 = pneg %p212
      // Predicated region
      $region29: #{tpu_custom_call.1} parent=5 // pred_check
        _
      $region30: #{tpu_custom_call.1} parent=5 // pred_check_branch
        %215 = sbr.rel (%p212) target = $region32
      $region31: #{tpu_custom_call.1} parent=5 // pred_region
        %s216 = ssub.s32 %s16, 1
        // Predicated region
        $region33: #{tpu_custom_call.1} parent=31 // pred_check
          %p217 = pneg %p54
        $region34: #{tpu_custom_call.1} parent=31 // pred_check_branch
          %219 = sbr.rel (%p217) target = $region36
        $region35: #{tpu_custom_call.1} parent=31 // pred_region
          %220 = dma.done [#allocation3], 1536
        $region36: #{tpu_custom_call.1} parent=31 // pred_fallthru
          _
        %s221 = sand.u32 %s21, 1
        %s222 = scalar_lea.sflag [#allocation6], %s221
        %s223 = sand.u32 %s67, 1
        %s224 = smul.addr %s223, 1152
        %s225 = scalar_lea.vmem [#allocation5], %s224
        // Predicated region
        $region37: #{tpu_custom_call.1} parent=31 // pred_check
          %p226 = pneg %p80
        $region38: #{tpu_custom_call.1} parent=31 // pred_check_branch
          %228 = sbr.rel (%p226) target = $region40
        $region39: #{tpu_custom_call.1} parent=31 // pred_region
          %229 = dma.done %s222, 18432
        $region40: #{tpu_custom_call.1} parent=31 // pred_fallthru
          _
        %s230 = sand.u32 %s21, 1
        %s231 = scalar_lea.sflag [#allocation6], %s230
        %s232 = sand.u32 %s93, 1
        %s233 = smul.addr %s232, 3
        %s234 = scalar_lea.vmem [#allocation7], %s233
        // Predicated region
        $region41: #{tpu_custom_call.1} parent=31 // pred_check
          %p235 = pneg %p106
        $region42: #{tpu_custom_call.1} parent=31 // pred_check_branch
          %237 = sbr.rel (%p235) target = $region44
        $region43: #{tpu_custom_call.1} parent=31 // pred_region
          %238 = dma.done %s231, 48
        $region44: #{tpu_custom_call.1} parent=31 // pred_fallthru
          _
        %p239 = pneg %p54
        %p240 = pneg %p51
        %s241 = sand.u32 %s21, 1
        %s242 = scalar_lea.sflag [#allocation6], %s241
        %s243 = sand.u32 %s67, 1
        %s244 = smul.addr %s243, 1152
        %s245 = scalar_lea.vmem [#allocation5], %s244
        %p246 = pneg %p80
        %p247 = pneg %p77
        %s248 = sand.u32 %s21, 1
        %s249 = scalar_lea.sflag [#allocation6], %s248
        %s250 = sand.u32 %s93, 1
        %s251 = smul.addr %s250, 3
        %s252 = scalar_lea.vmem [#allocation7], %s251
        %p253 = pneg %p106
        %p254 = pneg %p103
        %p255 = pneg %p134
        %p256 = pneg %p131
        %s257 = sand.u32 %s121, 1
        %s258 = scalar_lea.sflag [#allocation4], %s257
        %s259 = sand.u32 %s121, 1
        %s260 = smul.addr %s259, 48
        %s261 = scalar_lea.vmem [#allocation8], %s260
        %s262 = smul.u32 2, %s26
        %s263 = smul.u32 3, %s25
        %s264 = smul.u32 3, %s25
        %s265 = smul.u32 2, %s26
        %s266 = smul.u32 3, %s25
        %v268 = vld [vmem:[#allocation2] sm:$0xff]
        %v269 = vld [vmem:[#allocation2 + $0x8] sm:$0xff]
        %v270 = vld [vmem:[#allocation2 + $0x10] sm:$0xff]
        %v271 = vld [vmem:[#allocation2 + $0x18] sm:$0xff]
        %v272 = vld [vmem:[#allocation2 + $0x20] sm:$0xff]
        %v273 = vld [vmem:[#allocation2 + $0x28] sm:$0xff]
        %v274 = vld [vmem:[#allocation2 + $0x30] sm:$0xff]
        %v275 = vld [vmem:[#allocation2 + $0x38] sm:$0xff]
        %v276 = vld [vmem:[#allocation2 + $0x40] sm:$0xff]
        %v277 = vld [vmem:[#allocation2 + $0x48] sm:$0xff]
        %v278 = vld [vmem:[#allocation2 + $0x50] sm:$0xff]
        %v279 = vld [vmem:[#allocation2 + $0x58] sm:$0xff]
        %v280 = vpack.c.bf16 %v274, %v268
        %v281 = vpack.c.bf16 %v275, %v269
        %v282 = vpack.c.bf16 %v276, %v270
        %v283 = vpack.c.bf16 %v277, %v271
        %v284 = vpack.c.bf16 %v278, %v272
        %v285 = vpack.c.bf16 %v279, %v273
        %v286 = vld [vmem:[%s225] sm:$0xff]
        %v287 = vld [vmem:[%s225 + $0x8] sm:$0xf]
        %v288 = vld [vmem:[%s225 + $0xc] sm:$0xff]
        %v289 = vld [vmem:[%s225 + $0x14] sm:$0xf]
        %v290 = vld [vmem:[%s225 + $0x18] sm:$0xff]
        %v291 = vld [vmem:[%s225 + $0x20] sm:$0xf]
        %v292 = vld [vmem:[%s225 + $0x24] sm:$0xff]
        %v293 = vld [vmem:[%s225 + $0x2c] sm:$0xf]
        %v294 = vld [vmem:[%s225 + $0x30] sm:$0xff]
        %v295 = vld [vmem:[%s225 + $0x38] sm:$0xf]
        %v296 = vld [vmem:[%s225 + $0x3c] sm:$0xff]
        %v297 = vld [vmem:[%s225 + $0x44] sm:$0xf]
        %v298 = vld [vmem:[%s225 + $0x48] sm:$0xff]
        %v299 = vld [vmem:[%s225 + $0x50] sm:$0xf]
        %v300 = vld [vmem:[%s225 + $0x54] sm:$0xff]
        %v301 = vld [vmem:[%s225 + $0x5c] sm:$0xf]
        %v302 = vld [vmem:[%s225 + $0x60] sm:$0xff]
        %v303 = vld [vmem:[%s225 + $0x68] sm:$0xf]
        %v304 = vld [vmem:[%s225 + $0x6c] sm:$0xff]
        %v305 = vld [vmem:[%s225 + $0x74] sm:$0xf]
        %v306 = vld [vmem:[%s225 + $0x78] sm:$0xff]
        %v307 = vld [vmem:[%s225 + $0x80] sm:$0xf]
        %v308 = vld [vmem:[%s225 + $0x84] sm:$0xff]
        %v309 = vld [vmem:[%s225 + $0x8c] sm:$0xf]
        %v310 = vld [vmem:[%s225 + $0x90] sm:$0xff]
        %v311 = vld [vmem:[%s225 + $0x98] sm:$0xf]
        %v312 = vld [vmem:[%s225 + $0x9c] sm:$0xff]
        %v313 = vld [vmem:[%s225 + $0xa4] sm:$0xf]
        %v314 = vld [vmem:[%s225 + $0xa8] sm:$0xff]
        %v315 = vld [vmem:[%s225 + $0xb0] sm:$0xf]
        %v316 = vld [vmem:[%s225 + $0xb4] sm:$0xff]
        %v317 = vld [vmem:[%s225 + $0xbc] sm:$0xf]
        %v318 = vld [vmem:[%s225 + $0xc0] sm:$0xff]
        %v319 = vld [vmem:[%s225 + $0xc8] sm:$0xf]
        %v320 = vld [vmem:[%s225 + $0xcc] sm:$0xff]
        %v321 = vld [vmem:[%s225 + $0xd4] sm:$0xf]
        %v322 = vld [vmem:[%s225 + $0xd8] sm:$0xff]
        %v323 = vld [vmem:[%s225 + $0xe0] sm:$0xf]
        %v324 = vld [vmem:[%s225 + $0xe4] sm:$0xff]
        %v325 = vld [vmem:[%s225 + $0xec] sm:$0xf]
        %v326 = vld [vmem:[%s225 + $0xf0] sm:$0xff]
        %v327 = vld [vmem:[%s225 + $0xf8] sm:$0xf]
        %v328 = vld [vmem:[%s225 + $0xfc] sm:$0xff]
        %v329 = vld [vmem:[%s225 + $0x104] sm:$0xf]
        %v330 = vld [vmem:[%s225 + $0x108] sm:$0xff]
        %v331 = vld [vmem:[%s225 + $0x110] sm:$0xf]
        %v332 = vld [vmem:[%s225 + $0x114] sm:$0xff]
        %v333 = vld [vmem:[%s225 + $0x11c] sm:$0xf]
        %v334 = vld [vmem:[%s225 + $0x120] sm:$0xff]
        %v335 = vld [vmem:[%s225 + $0x128] sm:$0xf]
        %v336 = vld [vmem:[%s225 + $0x12c] sm:$0xff]
        %v337 = vld [vmem:[%s225 + $0x134] sm:$0xf]
        %v338 = vld [vmem:[%s225 + $0x138] sm:$0xff]
        %v339 = vld [vmem:[%s225 + $0x140] sm:$0xf]
        %v340 = vld [vmem:[%s225 + $0x144] sm:$0xff]
        %v341 = vld [vmem:[%s225 + $0x14c] sm:$0xf]
        %v342 = vld [vmem:[%s225 + $0x150] sm:$0xff]
        %v343 = vld [vmem:[%s225 + $0x158] sm:$0xf]
        %v344 = vld [vmem:[%s225 + $0x15c] sm:$0xff]
        %v345 = vld [vmem:[%s225 + $0x164] sm:$0xf]
        %v346 = vld [vmem:[%s225 + $0x168] sm:$0xff]
        %v347 = vld [vmem:[%s225 + $0x170] sm:$0xf]
        %v348 = vld [vmem:[%s225 + $0x174] sm:$0xff]
        %v349 = vld [vmem:[%s225 + $0x17c] sm:$0xf]
        %v350 = vld [vmem:[%s225 + $0x180] sm:$0xff]
        %v351 = vld [vmem:[%s225 + $0x188] sm:$0xf]
        %v352 = vld [vmem:[%s225 + $0x18c] sm:$0xff]
        %v353 = vld [vmem:[%s225 + $0x194] sm:$0xf]
        %v354 = vld [vmem:[%s225 + $0x198] sm:$0xff]
        %v355 = vld [vmem:[%s225 + $0x1a0] sm:$0xf]
        %v356 = vld [vmem:[%s225 + $0x1a4] sm:$0xff]
        %v357 = vld [vmem:[%s225 + $0x1ac] sm:$0xf]
        %v358 = vld [vmem:[%s225 + $0x1b0] sm:$0xff]
        %v359 = vld [vmem:[%s225 + $0x1b8] sm:$0xf]
        %v360 = vld [vmem:[%s225 + $0x1bc] sm:$0xff]
        %v361 = vld [vmem:[%s225 + $0x1c4] sm:$0xf]
        %v362 = vld [vmem:[%s225 + $0x1c8] sm:$0xff]
        %v363 = vld [vmem:[%s225 + $0x1d0] sm:$0xf]
        %v364 = vld [vmem:[%s225 + $0x1d4] sm:$0xff]
        %v365 = vld [vmem:[%s225 + $0x1dc] sm:$0xf]
        %v366 = vld [vmem:[%s225 + $0x1e0] sm:$0xff]
        %v367 = vld [vmem:[%s225 + $0x1e8] sm:$0xf]
        %v368 = vld [vmem:[%s225 + $0x1ec] sm:$0xff]
        %v369 = vld [vmem:[%s225 + $0x1f4] sm:$0xf]
        %v370 = vld [vmem:[%s225 + $0x1f8] sm:$0xff]
        %v371 = vld [vmem:[%s225 + $0x200] sm:$0xf]
        %v372 = vld [vmem:[%s225 + $0x204] sm:$0xff]
        %v373 = vld [vmem:[%s225 + $0x20c] sm:$0xf]
        %v374 = vld [vmem:[%s225 + $0x210] sm:$0xff]
        %v375 = vld [vmem:[%s225 + $0x218] sm:$0xf]
        %v376 = vld [vmem:[%s225 + $0x21c] sm:$0xff]
        %v377 = vld [vmem:[%s225 + $0x224] sm:$0xf]
        %v378 = vld [vmem:[%s225 + $0x228] sm:$0xff]
        %v379 = vld [vmem:[%s225 + $0x230] sm:$0xf]
        %v380 = vld [vmem:[%s225 + $0x234] sm:$0xff]
        %v381 = vld [vmem:[%s225 + $0x23c] sm:$0xf]
        %v382 = vld [vmem:[%s225 + $0x240] sm:$0xff]
        %v383 = vld [vmem:[%s225 + $0x248] sm:$0xf]
        %v384 = vld [vmem:[%s225 + $0x24c] sm:$0xff]
        %v385 = vld [vmem:[%s225 + $0x254] sm:$0xf]
        %v386 = vld [vmem:[%s225 + $0x258] sm:$0xff]
        %v387 = vld [vmem:[%s225 + $0x260] sm:$0xf]
        %v388 = vld [vmem:[%s225 + $0x264] sm:$0xff]
        %v389 = vld [vmem:[%s225 + $0x26c] sm:$0xf]
        %v390 = vld [vmem:[%s225 + $0x270] sm:$0xff]
        %v391 = vld [vmem:[%s225 + $0x278] sm:$0xf]
        %v392 = vld [vmem:[%s225 + $0x27c] sm:$0xff]
        %v393 = vld [vmem:[%s225 + $0x284] sm:$0xf]
        %v394 = vld [vmem:[%s225 + $0x288] sm:$0xff]
        %v395 = vld [vmem:[%s225 + $0x290] sm:$0xf]
        %v396 = vld [vmem:[%s225 + $0x294] sm:$0xff]
        %v397 = vld [vmem:[%s225 + $0x29c] sm:$0xf]
        %v398 = vld [vmem:[%s225 + $0x2a0] sm:$0xff]
        %v399 = vld [vmem:[%s225 + $0x2a8] sm:$0xf]
        %v400 = vld [vmem:[%s225 + $0x2ac] sm:$0xff]
        %v401 = vld [vmem:[%s225 + $0x2b4] sm:$0xf]
        %v402 = vld [vmem:[%s225 + $0x2b8] sm:$0xff]
        %v403 = vld [vmem:[%s225 + $0x2c0] sm:$0xf]
        %v404 = vld [vmem:[%s225 + $0x2c4] sm:$0xff]
        %v405 = vld [vmem:[%s225 + $0x2cc] sm:$0xf]
        %v406 = vld [vmem:[%s225 + $0x2d0] sm:$0xff]
        %v407 = vld [vmem:[%s225 + $0x2d8] sm:$0xf]
        %v408 = vld [vmem:[%s225 + $0x2dc] sm:$0xff]
        %v409 = vld [vmem:[%s225 + $0x2e4] sm:$0xf]
        %v410 = vld [vmem:[%s225 + $0x2e8] sm:$0xff]
        %v411 = vld [vmem:[%s225 + $0x2f0] sm:$0xf]
        %v412 = vld [vmem:[%s225 + $0x2f4] sm:$0xff]
        %v413 = vld [vmem:[%s225 + $0x2fc] sm:$0xf]
        %v414 = vld [vmem:[%s225 + $0x300] sm:$0xff]
        %v415 = vld [vmem:[%s225 + $0x308] sm:$0xf]
        %v416 = vld [vmem:[%s225 + $0x30c] sm:$0xff]
        %v417 = vld [vmem:[%s225 + $0x314] sm:$0xf]
        %v418 = vld [vmem:[%s225 + $0x318] sm:$0xff]
        %v419 = vld [vmem:[%s225 + $0x320] sm:$0xf]
        %v420 = vld [vmem:[%s225 + $0x324] sm:$0xff]
        %v421 = vld [vmem:[%s225 + $0x32c] sm:$0xf]
        %v422 = vld [vmem:[%s225 + $0x330] sm:$0xff]
        %v423 = vld [vmem:[%s225 + $0x338] sm:$0xf]
        %v424 = vld [vmem:[%s225 + $0x33c] sm:$0xff]
        %v425 = vld [vmem:[%s225 + $0x344] sm:$0xf]
        %v426 = vld [vmem:[%s225 + $0x348] sm:$0xff]
        %v427 = vld [vmem:[%s225 + $0x350] sm:$0xf]
        %v428 = vld [vmem:[%s225 + $0x354] sm:$0xff]
        %v429 = vld [vmem:[%s225 + $0x35c] sm:$0xf]
        %v430 = vld [vmem:[%s225 + $0x360] sm:$0xff]
        %v431 = vld [vmem:[%s225 + $0x368] sm:$0xf]
        %v432 = vld [vmem:[%s225 + $0x36c] sm:$0xff]
        %v433 = vld [vmem:[%s225 + $0x374] sm:$0xf]
        %v434 = vld [vmem:[%s225 + $0x378] sm:$0xff]
        %v435 = vld [vmem:[%s225 + $0x380] sm:$0xf]
        %v436 = vld [vmem:[%s225 + $0x384] sm:$0xff]
        %v437 = vld [vmem:[%s225 + $0x38c] sm:$0xf]
        %v438 = vld [vmem:[%s225 + $0x390] sm:$0xff]
        %v439 = vld [vmem:[%s225 + $0x398] sm:$0xf]
        %v440 = vld [vmem:[%s225 + $0x39c] sm:$0xff]
        %v441 = vld [vmem:[%s225 + $0x3a4] sm:$0xf]
        %v442 = vld [vmem:[%s225 + $0x3a8] sm:$0xff]
        %v443 = vld [vmem:[%s225 + $0x3b0] sm:$0xf]
        %v444 = vld [vmem:[%s225 + $0x3b4] sm:$0xff]
        %v445 = vld [vmem:[%s225 + $0x3bc] sm:$0xf]
        %v446 = vld [vmem:[%s225 + $0x3c0] sm:$0xff]
        %v447 = vld [vmem:[%s225 + $0x3c8] sm:$0xf]
        %v448 = vld [vmem:[%s225 + $0x3cc] sm:$0xff]
        %v449 = vld [vmem:[%s225 + $0x3d4] sm:$0xf]
        %v450 = vld [vmem:[%s225 + $0x3d8] sm:$0xff]
        %v451 = vld [vmem:[%s225 + $0x3e0] sm:$0xf]
        %v452 = vld [vmem:[%s225 + $0x3e4] sm:$0xff]
        %v453 = vld [vmem:[%s225 + $0x3ec] sm:$0xf]
        %v454 = vld [vmem:[%s225 + $0x3f0] sm:$0xff]
        %v455 = vld [vmem:[%s225 + $0x3f8] sm:$0xf]
        %v456 = vld [vmem:[%s225 + $0x3fc] sm:$0xff]
        %v457 = vld [vmem:[%s225 + $0x404] sm:$0xf]
        %v458 = vld [vmem:[%s225 + $0x408] sm:$0xff]
        %v459 = vld [vmem:[%s225 + $0x410] sm:$0xf]
        %v460 = vld [vmem:[%s225 + $0x414] sm:$0xff]
        %v461 = vld [vmem:[%s225 + $0x41c] sm:$0xf]
        %v462 = vld [vmem:[%s225 + $0x420] sm:$0xff]
        %v463 = vld [vmem:[%s225 + $0x428] sm:$0xf]
        %v464 = vld [vmem:[%s225 + $0x42c] sm:$0xff]
        %v465 = vld [vmem:[%s225 + $0x434] sm:$0xf]
        %v466 = vld [vmem:[%s225 + $0x438] sm:$0xff]
        %v467 = vld [vmem:[%s225 + $0x440] sm:$0xf]
        %v468 = vld [vmem:[%s225 + $0x444] sm:$0xff]
        %v469 = vld [vmem:[%s225 + $0x44c] sm:$0xf]
        %v470 = vld [vmem:[%s225 + $0x450] sm:$0xff]
        %v471 = vld [vmem:[%s225 + $0x458] sm:$0xf]
        %v472 = vld [vmem:[%s225 + $0x45c] sm:$0xff]
        %v473 = vld [vmem:[%s225 + $0x464] sm:$0xf]
        %v474 = vld [vmem:[%s225 + $0x468] sm:$0xff]
        %v475 = vld [vmem:[%s225 + $0x470] sm:$0xf]
        %v476 = vld [vmem:[%s225 + $0x474] sm:$0xff]
        %v477 = vld [vmem:[%s225 + $0x47c] sm:$0xf]
        %v478 = vld [vmem:[%s234] sm:$0x7]
        %v480 = vlaneseq
        %v481 = vshrl.u32 %v480, 7
        %v482 = vsub.s32 0, %v481
        %v483 = vrot.slane %v478, %v482
        %v484 = vlaneseq
        %v485 = vshrl.u32 %v484, 7
        %v486 = vsub.s32 1, %v485
        %v487 = vrot.slane %v478, %v486
        %v488 = vlaneseq
        %v489 = vshrl.u32 %v488, 7
        %v490 = vsub.s32 2, %v489
        %v491 = vrot.slane %v478, %v490
        %v687 = vunpack.c.l.b16 %v286
        %v688 = vunpack.c.h.b16 %v286
        %v689 = vunpack.c.l.b16 %v287
        %v690 = vunpack.c.l.b16 %v288
        %v691 = vunpack.c.h.b16 %v288
        %v692 = vunpack.c.l.b16 %v289
        %v693 = vunpack.c.l.b16 %v290
        %v694 = vunpack.c.h.b16 %v290
        %v695 = vunpack.c.l.b16 %v291
        %v696 = vunpack.c.l.b16 %v292
        %v697 = vunpack.c.h.b16 %v292
        %v698 = vunpack.c.l.b16 %v293
        %v699 = vunpack.c.l.b16 %v294
        %v700 = vunpack.c.h.b16 %v294
        %v701 = vunpack.c.l.b16 %v295
        %v702 = vunpack.c.l.b16 %v296
        %v703 = vunpack.c.h.b16 %v296
        %v704 = vunpack.c.l.b16 %v297
        %v705 = vunpack.c.l.b16 %v298
        %v706 = vunpack.c.h.b16 %v298
        %v707 = vunpack.c.l.b16 %v299
        %v708 = vunpack.c.l.b16 %v300
        %v709 = vunpack.c.h.b16 %v300
        %v710 = vunpack.c.l.b16 %v301
        %v711 = vunpack.c.l.b16 %v302
        %v712 = vunpack.c.h.b16 %v302
        %v713 = vunpack.c.l.b16 %v303
        %v714 = vunpack.c.l.b16 %v304
        %v715 = vunpack.c.h.b16 %v304
        %v716 = vunpack.c.l.b16 %v305
        %v717 = vunpack.c.l.b16 %v306
        %v718 = vunpack.c.h.b16 %v306
        %v719 = vunpack.c.l.b16 %v307
        %v720 = vunpack.c.l.b16 %v308
        %v721 = vunpack.c.h.b16 %v308
        %v722 = vunpack.c.l.b16 %v309
        %v723 = vunpack.c.l.b16 %v310
        %v724 = vunpack.c.h.b16 %v310
        %v725 = vunpack.c.l.b16 %v311
        %v726 = vunpack.c.l.b16 %v312
        %v727 = vunpack.c.h.b16 %v312
        %v728 = vunpack.c.l.b16 %v313
        %v729 = vunpack.c.l.b16 %v314
        %v730 = vunpack.c.h.b16 %v314
        %v731 = vunpack.c.l.b16 %v315
        %v732 = vunpack.c.l.b16 %v316
        %v733 = vunpack.c.h.b16 %v316
        %v734 = vunpack.c.l.b16 %v317
        %v735 = vunpack.c.l.b16 %v318
        %v736 = vunpack.c.h.b16 %v318
        %v737 = vunpack.c.l.b16 %v319
        %v738 = vunpack.c.l.b16 %v320
        %v739 = vunpack.c.h.b16 %v320
        %v740 = vunpack.c.l.b16 %v321
        %v741 = vunpack.c.l.b16 %v322
        %v742 = vunpack.c.h.b16 %v322
        %v743 = vunpack.c.l.b16 %v323
        %v744 = vunpack.c.l.b16 %v324
        %v745 = vunpack.c.h.b16 %v324
        %v746 = vunpack.c.l.b16 %v325
        %v747 = vunpack.c.l.b16 %v326
        %v748 = vunpack.c.h.b16 %v326
        %v749 = vunpack.c.l.b16 %v327
        %v750 = vunpack.c.l.b16 %v328
        %v751 = vunpack.c.h.b16 %v328
        %v752 = vunpack.c.l.b16 %v329
        %v753 = vunpack.c.l.b16 %v330
        %v754 = vunpack.c.h.b16 %v330
        %v755 = vunpack.c.l.b16 %v331
        %v756 = vunpack.c.l.b16 %v332
        %v757 = vunpack.c.h.b16 %v332
        %v758 = vunpack.c.l.b16 %v333
        %v759 = vunpack.c.l.b16 %v334
        %v760 = vunpack.c.h.b16 %v334
        %v761 = vunpack.c.l.b16 %v335
        %v762 = vunpack.c.l.b16 %v336
        %v763 = vunpack.c.h.b16 %v336
        %v764 = vunpack.c.l.b16 %v337
        %v765 = vunpack.c.l.b16 %v338
        %v766 = vunpack.c.h.b16 %v338
        %v767 = vunpack.c.l.b16 %v339
        %v768 = vunpack.c.l.b16 %v340
        %v769 = vunpack.c.h.b16 %v340
        %v770 = vunpack.c.l.b16 %v341
        %v771 = vunpack.c.l.b16 %v342
        %v772 = vunpack.c.h.b16 %v342
        %v773 = vunpack.c.l.b16 %v343
        %v774 = vunpack.c.l.b16 %v344
        %v775 = vunpack.c.h.b16 %v344
        %v776 = vunpack.c.l.b16 %v345
        %v777 = vunpack.c.l.b16 %v346
        %v778 = vunpack.c.h.b16 %v346
        %v779 = vunpack.c.l.b16 %v347
        %v780 = vunpack.c.l.b16 %v348
        %v781 = vunpack.c.h.b16 %v348
        %v782 = vunpack.c.l.b16 %v349
        %v783 = vunpack.c.l.b16 %v350
        %v784 = vunpack.c.h.b16 %v350
        %v785 = vunpack.c.l.b16 %v351
        %v786 = vunpack.c.l.b16 %v352
        %v787 = vunpack.c.h.b16 %v352
        %v788 = vunpack.c.l.b16 %v353
        %v789 = vunpack.c.l.b16 %v354
        %v790 = vunpack.c.h.b16 %v354
        %v791 = vunpack.c.l.b16 %v355
        %v792 = vunpack.c.l.b16 %v356
        %v793 = vunpack.c.h.b16 %v356
        %v794 = vunpack.c.l.b16 %v357
        %v795 = vunpack.c.l.b16 %v358
        %v796 = vunpack.c.h.b16 %v358
        %v797 = vunpack.c.l.b16 %v359
        %v798 = vunpack.c.l.b16 %v360
        %v799 = vunpack.c.h.b16 %v360
        %v800 = vunpack.c.l.b16 %v361
        %v801 = vunpack.c.l.b16 %v362
        %v802 = vunpack.c.h.b16 %v362
        %v803 = vunpack.c.l.b16 %v363
        %v804 = vunpack.c.l.b16 %v364
        %v805 = vunpack.c.h.b16 %v364
        %v806 = vunpack.c.l.b16 %v365
        %v807 = vunpack.c.l.b16 %v366
        %v808 = vunpack.c.h.b16 %v366
        %v809 = vunpack.c.l.b16 %v367
        %v810 = vunpack.c.l.b16 %v368
        %v811 = vunpack.c.h.b16 %v368
        %v812 = vunpack.c.l.b16 %v369
        %v813 = vunpack.c.l.b16 %v370
        %v814 = vunpack.c.h.b16 %v370
        %v815 = vunpack.c.l.b16 %v371
        %v816 = vunpack.c.l.b16 %v372
        %v817 = vunpack.c.h.b16 %v372
        %v818 = vunpack.c.l.b16 %v373
        %v819 = vunpack.c.l.b16 %v374
        %v820 = vunpack.c.h.b16 %v374
        %v821 = vunpack.c.l.b16 %v375
        %v822 = vunpack.c.l.b16 %v376
        %v823 = vunpack.c.h.b16 %v376
        %v824 = vunpack.c.l.b16 %v377
        %v825 = vunpack.c.l.b16 %v378
        %v826 = vunpack.c.h.b16 %v378
        %v827 = vunpack.c.l.b16 %v379
        %v828 = vunpack.c.l.b16 %v380
        %v829 = vunpack.c.h.b16 %v380
        %v830 = vunpack.c.l.b16 %v381
        %v831 = vunpack.c.l.b16 %v382
        %v832 = vunpack.c.h.b16 %v382
        %v833 = vunpack.c.l.b16 %v383
        %v834 = vunpack.c.l.b16 %v384
        %v835 = vunpack.c.h.b16 %v384
        %v836 = vunpack.c.l.b16 %v385
        %v837 = vunpack.c.l.b16 %v386
        %v838 = vunpack.c.h.b16 %v386
        %v839 = vunpack.c.l.b16 %v387
        %v840 = vunpack.c.l.b16 %v388
        %v841 = vunpack.c.h.b16 %v388
        %v842 = vunpack.c.l.b16 %v389
        %v843 = vunpack.c.l.b16 %v390
        %v844 = vunpack.c.h.b16 %v390
        %v845 = vunpack.c.l.b16 %v391
        %v846 = vunpack.c.l.b16 %v392
        %v847 = vunpack.c.h.b16 %v392
        %v848 = vunpack.c.l.b16 %v393
        %v849 = vunpack.c.l.b16 %v394
        %v850 = vunpack.c.h.b16 %v394
        %v851 = vunpack.c.l.b16 %v395
        %v852 = vunpack.c.l.b16 %v396
        %v853 = vunpack.c.h.b16 %v396
        %v854 = vunpack.c.l.b16 %v397
        %v855 = vunpack.c.l.b16 %v398
        %v856 = vunpack.c.h.b16 %v398
        %v857 = vunpack.c.l.b16 %v399
        %v858 = vunpack.c.l.b16 %v400
        %v859 = vunpack.c.h.b16 %v400
        %v860 = vunpack.c.l.b16 %v401
        %v861 = vunpack.c.l.b16 %v402
        %v862 = vunpack.c.h.b16 %v402
        %v863 = vunpack.c.l.b16 %v403
        %v864 = vunpack.c.l.b16 %v404
        %v865 = vunpack.c.h.b16 %v404
        %v866 = vunpack.c.l.b16 %v405
        %v867 = vunpack.c.l.b16 %v406
        %v868 = vunpack.c.h.b16 %v406
        %v869 = vunpack.c.l.b16 %v407
        %v870 = vunpack.c.l.b16 %v408
        %v871 = vunpack.c.h.b16 %v408
        %v872 = vunpack.c.l.b16 %v409
        %v873 = vunpack.c.l.b16 %v410
        %v874 = vunpack.c.h.b16 %v410
        %v875 = vunpack.c.l.b16 %v411
        %v876 = vunpack.c.l.b16 %v412
        %v877 = vunpack.c.h.b16 %v412
        %v878 = vunpack.c.l.b16 %v413
        %v879 = vunpack.c.l.b16 %v414
        %v880 = vunpack.c.h.b16 %v414
        %v881 = vunpack.c.l.b16 %v415
        %v882 = vunpack.c.l.b16 %v416
        %v883 = vunpack.c.h.b16 %v416
        %v884 = vunpack.c.l.b16 %v417
        %v885 = vunpack.c.l.b16 %v418
        %v886 = vunpack.c.h.b16 %v418
        %v887 = vunpack.c.l.b16 %v419
        %v888 = vunpack.c.l.b16 %v420
        %v889 = vunpack.c.h.b16 %v420
        %v890 = vunpack.c.l.b16 %v421
        %v891 = vunpack.c.l.b16 %v422
        %v892 = vunpack.c.h.b16 %v422
        %v893 = vunpack.c.l.b16 %v423
        %v894 = vunpack.c.l.b16 %v424
        %v895 = vunpack.c.h.b16 %v424
        %v896 = vunpack.c.l.b16 %v425
        %v897 = vunpack.c.l.b16 %v426
        %v898 = vunpack.c.h.b16 %v426
        %v899 = vunpack.c.l.b16 %v427
        %v900 = vunpack.c.l.b16 %v428
        %v901 = vunpack.c.h.b16 %v428
        %v902 = vunpack.c.l.b16 %v429
        %v903 = vunpack.c.l.b16 %v430
        %v904 = vunpack.c.h.b16 %v430
        %v905 = vunpack.c.l.b16 %v431
        %v906 = vunpack.c.l.b16 %v432
        %v907 = vunpack.c.h.b16 %v432
        %v908 = vunpack.c.l.b16 %v433
        %v909 = vunpack.c.l.b16 %v434
        %v910 = vunpack.c.h.b16 %v434
        %v911 = vunpack.c.l.b16 %v435
        %v912 = vunpack.c.l.b16 %v436
        %v913 = vunpack.c.h.b16 %v436
        %v914 = vunpack.c.l.b16 %v437
        %v915 = vunpack.c.l.b16 %v438
        %v916 = vunpack.c.h.b16 %v438
        %v917 = vunpack.c.l.b16 %v439
        %v918 = vunpack.c.l.b16 %v440
        %v919 = vunpack.c.h.b16 %v440
        %v920 = vunpack.c.l.b16 %v441
        %v921 = vunpack.c.l.b16 %v442
        %v922 = vunpack.c.h.b16 %v442
        %v923 = vunpack.c.l.b16 %v443
        %v924 = vunpack.c.l.b16 %v444
        %v925 = vunpack.c.h.b16 %v444
        %v926 = vunpack.c.l.b16 %v445
        %v927 = vunpack.c.l.b16 %v446
        %v928 = vunpack.c.h.b16 %v446
        %v929 = vunpack.c.l.b16 %v447
        %v930 = vunpack.c.l.b16 %v448
        %v931 = vunpack.c.h.b16 %v448
        %v932 = vunpack.c.l.b16 %v449
        %v933 = vunpack.c.l.b16 %v450
        %v934 = vunpack.c.h.b16 %v450
        %v935 = vunpack.c.l.b16 %v451
        %v936 = vunpack.c.l.b16 %v452
        %v937 = vunpack.c.h.b16 %v452
        %v938 = vunpack.c.l.b16 %v453
        %v939 = vunpack.c.l.b16 %v454
        %v940 = vunpack.c.h.b16 %v454
        %v941 = vunpack.c.l.b16 %v455
        %v942 = vunpack.c.l.b16 %v456
        %v943 = vunpack.c.h.b16 %v456
        %v944 = vunpack.c.l.b16 %v457
        %v945 = vunpack.c.l.b16 %v458
        %v946 = vunpack.c.h.b16 %v458
        %v947 = vunpack.c.l.b16 %v459
        %v948 = vunpack.c.l.b16 %v460
        %v949 = vunpack.c.h.b16 %v460
        %v950 = vunpack.c.l.b16 %v461
        %v951 = vunpack.c.l.b16 %v462
        %v952 = vunpack.c.h.b16 %v462
        %v953 = vunpack.c.l.b16 %v463
        %v954 = vunpack.c.l.b16 %v464
        %v955 = vunpack.c.h.b16 %v464
        %v956 = vunpack.c.l.b16 %v465
        %v957 = vunpack.c.l.b16 %v466
        %v958 = vunpack.c.h.b16 %v466
        %v959 = vunpack.c.l.b16 %v467
        %v960 = vunpack.c.l.b16 %v468
        %v961 = vunpack.c.h.b16 %v468
        %v962 = vunpack.c.l.b16 %v469
        %v963 = vunpack.c.l.b16 %v470
        %v964 = vunpack.c.h.b16 %v470
        %v965 = vunpack.c.l.b16 %v471
        %v966 = vunpack.c.l.b16 %v472
        %v967 = vunpack.c.h.b16 %v472
        %v968 = vunpack.c.l.b16 %v473
        %v969 = vunpack.c.l.b16 %v474
        %v970 = vunpack.c.h.b16 %v474
        %v971 = vunpack.c.l.b16 %v475
        %v972 = vunpack.c.l.b16 %v476
        %v973 = vunpack.c.h.b16 %v476
        %v974 = vunpack.c.l.b16 %v477
        %v975 = vpack.c.b16 %v690, %v687
        %v976 = vpack.c.b16 %v691, %v688
        %v977 = vpack.c.b16 %v692, %v689
        %v978 = vpack.c.b16 %v696, %v693
        %v979 = vpack.c.b16 %v697, %v694
        %v980 = vpack.c.b16 %v698, %v695
        %v981 = vpack.c.b16 %v702, %v699
        %v982 = vpack.c.b16 %v703, %v700
        %v983 = vpack.c.b16 %v704, %v701
        %v984 = vpack.c.b16 %v708, %v705
        %v985 = vpack.c.b16 %v709, %v706
        %v986 = vpack.c.b16 %v710, %v707
        %v987 = vpack.c.b16 %v714, %v711
        %v988 = vpack.c.b16 %v715, %v712
        %v989 = vpack.c.b16 %v716, %v713
        %v990 = vpack.c.b16 %v720, %v717
        %v991 = vpack.c.b16 %v721, %v718
        %v992 = vpack.c.b16 %v722, %v719
        %v993 = vpack.c.b16 %v726, %v723
        %v994 = vpack.c.b16 %v727, %v724
        %v995 = vpack.c.b16 %v728, %v725
        %v996 = vpack.c.b16 %v732, %v729
        %v997 = vpack.c.b16 %v733, %v730
        %v998 = vpack.c.b16 %v734, %v731
        %v999 = vpack.c.b16 %v738, %v735
        %v1000 = vpack.c.b16 %v739, %v736
        %v1001 = vpack.c.b16 %v740, %v737
        %v1002 = vpack.c.b16 %v744, %v741
        %v1003 = vpack.c.b16 %v745, %v742
        %v1004 = vpack.c.b16 %v746, %v743
        %v1005 = vpack.c.b16 %v750, %v747
        %v1006 = vpack.c.b16 %v751, %v748
        %v1007 = vpack.c.b16 %v752, %v749
        %v1008 = vpack.c.b16 %v756, %v753
        %v1009 = vpack.c.b16 %v757, %v754
        %v1010 = vpack.c.b16 %v758, %v755
        %v1011 = vpack.c.b16 %v762, %v759
        %v1012 = vpack.c.b16 %v763, %v760
        %v1013 = vpack.c.b16 %v764, %v761
        %v1014 = vpack.c.b16 %v768, %v765
        %v1015 = vpack.c.b16 %v769, %v766
        %v1016 = vpack.c.b16 %v770, %v767
        %v1017 = vpack.c.b16 %v774, %v771
        %v1018 = vpack.c.b16 %v775, %v772
        %v1019 = vpack.c.b16 %v776, %v773
        %v1020 = vpack.c.b16 %v780, %v777
        %v1021 = vpack.c.b16 %v781, %v778
        %v1022 = vpack.c.b16 %v782, %v779
        %v1023 = vpack.c.b16 %v786, %v783
        %v1024 = vpack.c.b16 %v787, %v784
        %v1025 = vpack.c.b16 %v788, %v785
        %v1026 = vpack.c.b16 %v792, %v789
        %v1027 = vpack.c.b16 %v793, %v790
        %v1028 = vpack.c.b16 %v794, %v791
        %v1029 = vpack.c.b16 %v798, %v795
        %v1030 = vpack.c.b16 %v799, %v796
        %v1031 = vpack.c.b16 %v800, %v797
        %v1032 = vpack.c.b16 %v804, %v801
        %v1033 = vpack.c.b16 %v805, %v802
        %v1034 = vpack.c.b16 %v806, %v803
        %v1035 = vpack.c.b16 %v810, %v807
        %v1036 = vpack.c.b16 %v811, %v808
        %v1037 = vpack.c.b16 %v812, %v809
        %v1038 = vpack.c.b16 %v816, %v813
        %v1039 = vpack.c.b16 %v817, %v814
        %v1040 = vpack.c.b16 %v818, %v815
        %v1041 = vpack.c.b16 %v822, %v819
        %v1042 = vpack.c.b16 %v823, %v820
        %v1043 = vpack.c.b16 %v824, %v821
        %v1044 = vpack.c.b16 %v828, %v825
        %v1045 = vpack.c.b16 %v829, %v826
        %v1046 = vpack.c.b16 %v830, %v827
        %v1047 = vpack.c.b16 %v834, %v831
        %v1048 = vpack.c.b16 %v835, %v832
        %v1049 = vpack.c.b16 %v836, %v833
        %v1050 = vpack.c.b16 %v840, %v837
        %v1051 = vpack.c.b16 %v841, %v838
        %v1052 = vpack.c.b16 %v842, %v839
        %v1053 = vpack.c.b16 %v846, %v843
        %v1054 = vpack.c.b16 %v847, %v844
        %v1055 = vpack.c.b16 %v848, %v845
        %v1056 = vpack.c.b16 %v852, %v849
        %v1057 = vpack.c.b16 %v853, %v850
        %v1058 = vpack.c.b16 %v854, %v851
        %v1059 = vpack.c.b16 %v858, %v855
        %v1060 = vpack.c.b16 %v859, %v856
        %v1061 = vpack.c.b16 %v860, %v857
        %v1062 = vpack.c.b16 %v864, %v861
        %v1063 = vpack.c.b16 %v865, %v862
        %v1064 = vpack.c.b16 %v866, %v863
        %v1065 = vpack.c.b16 %v870, %v867
        %v1066 = vpack.c.b16 %v871, %v868
        %v1067 = vpack.c.b16 %v872, %v869
        %v1068 = vpack.c.b16 %v876, %v873
        %v1069 = vpack.c.b16 %v877, %v874
        %v1070 = vpack.c.b16 %v878, %v875
        %v1071 = vpack.c.b16 %v882, %v879
        %v1072 = vpack.c.b16 %v883, %v880
        %v1073 = vpack.c.b16 %v884, %v881
        %v1074 = vpack.c.b16 %v888, %v885
        %v1075 = vpack.c.b16 %v889, %v886
        %v1076 = vpack.c.b16 %v890, %v887
        %v1077 = vpack.c.b16 %v894, %v891
        %v1078 = vpack.c.b16 %v895, %v892
        %v1079 = vpack.c.b16 %v896, %v893
        %v1080 = vpack.c.b16 %v900, %v897
        %v1081 = vpack.c.b16 %v901, %v898
        %v1082 = vpack.c.b16 %v902, %v899
        %v1083 = vpack.c.b16 %v906, %v903
        %v1084 = vpack.c.b16 %v907, %v904
        %v1085 = vpack.c.b16 %v908, %v905
        %v1086 = vpack.c.b16 %v912, %v909
        %v1087 = vpack.c.b16 %v913, %v910
        %v1088 = vpack.c.b16 %v914, %v911
        %v1089 = vpack.c.b16 %v918, %v915
        %v1090 = vpack.c.b16 %v919, %v916
        %v1091 = vpack.c.b16 %v920, %v917
        %v1092 = vpack.c.b16 %v924, %v921
        %v1093 = vpack.c.b16 %v925, %v922
        %v1094 = vpack.c.b16 %v926, %v923
        %v1095 = vpack.c.b16 %v930, %v927
        %v1096 = vpack.c.b16 %v931, %v928
        %v1097 = vpack.c.b16 %v932, %v929
        %v1098 = vpack.c.b16 %v936, %v933
        %v1099 = vpack.c.b16 %v937, %v934
        %v1100 = vpack.c.b16 %v938, %v935
        %v1101 = vpack.c.b16 %v942, %v939
        %v1102 = vpack.c.b16 %v943, %v940
        %v1103 = vpack.c.b16 %v944, %v941
        %v1104 = vpack.c.b16 %v948, %v945
        %v1105 = vpack.c.b16 %v949, %v946
        %v1106 = vpack.c.b16 %v950, %v947
        %v1107 = vpack.c.b16 %v954, %v951
        %v1108 = vpack.c.b16 %v955, %v952
        %v1109 = vpack.c.b16 %v956, %v953
        %v1110 = vpack.c.b16 %v960, %v957
        %v1111 = vpack.c.b16 %v961, %v958
        %v1112 = vpack.c.b16 %v962, %v959
        %v1113 = vpack.c.b16 %v966, %v963
        %v1114 = vpack.c.b16 %v967, %v964
        %v1115 = vpack.c.b16 %v968, %v965
        %v1116 = vpack.c.b16 %v972, %v969
        %v1117 = vpack.c.b16 %v973, %v970
        %v1118 = vpack.c.b16 %v974, %v971
        %1263 = vmatprep.subr.bf16.mxu0 %v997
        %1264 = vmatpush1.bf16.msra.mxu0 %v996
        %1265 = vmatprep.subr.bf16.mxu0 %v994
        %1266 = vmatpush1.bf16.msra.mxu0 %v993
        %1267 = vmatprep.subr.bf16.mxu0 %v991
        %1268 = vmatpush1.bf16.msra.mxu0 %v990
        %1269 = vmatprep.subr.bf16.mxu0 %v988
        %1270 = vmatpush1.bf16.msra.mxu0 %v987
        %1271 = vmatprep.subr.bf16.mxu0 %v985
        %1272 = vmatpush1.bf16.msra.mxu0 %v984
        %1273 = vmatprep.subr.bf16.mxu0 %v982
        %1274 = vmatpush1.bf16.msra.mxu0 %v981
        %1275 = vmatprep.subr.bf16.mxu0 %v979
        %1276 = vmatpush1.bf16.msra.mxu0 %v978
        %1277 = vmatprep.subr.bf16.mxu0 %v976
        %1278 = vmatpush1.bf16.msra.mxu0 %v975
        %1279 = vmatprep.subr.bf16.mxu0 %v1021
        %1280 = vmatpush2.bf16.msra.mxu0 %v1020
        %1281 = vmatprep.subr.bf16.mxu0 %v1018
        %1282 = vmatpush2.bf16.msra.mxu0 %v1017
        %1283 = vmatprep.subr.bf16.mxu0 %v1015
        %1284 = vmatpush2.bf16.msra.mxu0 %v1014
        %1285 = vmatprep.subr.bf16.mxu0 %v1012
        %1286 = vmatpush2.bf16.msra.mxu0 %v1011
        %1287 = vmatprep.subr.bf16.mxu0 %v1009
        %1288 = vmatpush2.bf16.msra.mxu0 %v1008
        %1289 = vmatprep.subr.bf16.mxu0 %v1006
        %1290 = vmatpush2.bf16.msra.mxu0 %v1005
        %1291 = vmatprep.subr.bf16.mxu0 %v1003
        %1292 = vmatpush2.bf16.msra.mxu0 %v1002
        %1293 = vmatprep.subr.bf16.mxu0 %v1000
        %1294 = vmatpush2.bf16.msra.mxu0 %v999
        %1295 = vmatprep.mubr.bf16.mxu0 %v281
        %1296 = vmatmul.mubr.bf16.gmra.mxu0 %v280
        %v1297 = vpop.f32.mrf.mxu0
        %v1298 = vadd.f32 %v483, %v1297
        %v1299 = vpop.f32.mrf.mxu0
        %v1300 = vadd.f32 %v487, %v1299
        %v1301 = vpop.f32.mrf.mxu0
        %v1302 = vadd.f32 %v483, %v1301
        %v1303 = vpop.f32.mrf.mxu0
        %v1304 = vadd.f32 %v487, %v1303
        %1305 = vdwg.mxu0
        %1306 = vmatprep.subr.bf16.mxu0 %v1045
        %1307 = vmatpush1.bf16.msra.mxu0 %v1044
        %1308 = vmatprep.subr.bf16.mxu0 %v1042
        %1309 = vmatpush1.bf16.msra.mxu0 %v1041
        %1310 = vmatprep.subr.bf16.mxu0 %v1039
        %1311 = vmatpush1.bf16.msra.mxu0 %v1038
        %1312 = vmatprep.subr.bf16.mxu0 %v1036
        %1313 = vmatpush1.bf16.msra.mxu0 %v1035
        %1314 = vmatprep.subr.bf16.mxu0 %v1033
        %1315 = vmatpush1.bf16.msra.mxu0 %v1032
        %1316 = vmatprep.subr.bf16.mxu0 %v1030
        %1317 = vmatpush1.bf16.msra.mxu0 %v1029
        %1318 = vmatprep.subr.bf16.mxu0 %v1027
        %1319 = vmatpush1.bf16.msra.mxu0 %v1026
        %1320 = vmatprep.subr.bf16.mxu0 %v1024
        %1321 = vmatpush1.bf16.msra.mxu0 %v1023
        %1322 = vmatprep.subr.bf16.mxu0 %v1069
        %1323 = vmatpush2.bf16.msra.mxu0 %v1068
        %1324 = vmatprep.subr.bf16.mxu0 %v1066
        %1325 = vmatpush2.bf16.msra.mxu0 %v1065
        %1326 = vmatprep.subr.bf16.mxu0 %v1063
        %1327 = vmatpush2.bf16.msra.mxu0 %v1062
        %1328 = vmatprep.subr.bf16.mxu0 %v1060
        %1329 = vmatpush2.bf16.msra.mxu0 %v1059
        %1330 = vmatprep.subr.bf16.mxu0 %v1057
        %1331 = vmatpush2.bf16.msra.mxu0 %v1056
        %1332 = vmatprep.subr.bf16.mxu0 %v1054
        %1333 = vmatpush2.bf16.msra.mxu0 %v1053
        %1334 = vmatprep.subr.bf16.mxu0 %v1051
        %1335 = vmatpush2.bf16.msra.mxu0 %v1050
        %1336 = vmatprep.subr.bf16.mxu0 %v1048
        %1337 = vmatpush2.bf16.msra.mxu0 %v1047
        %1338 = vmatprep.mubr.bf16.mxu0 %v283
        %1339 = vmatmul.mubr.bf16.gmra.mxu0 %v282
        %v1340 = vpop.f32.mrf.mxu0
        %v1341 = vadd.f32 %v1298, %v1340
        %v1342 = vpop.f32.mrf.mxu0
        %v1343 = vadd.f32 %v1300, %v1342
        %v1344 = vpop.f32.mrf.mxu0
        %v1345 = vadd.f32 %v1302, %v1344
        %v1346 = vpop.f32.mrf.mxu0
        %v1347 = vadd.f32 %v1304, %v1346
        %1348 = vdwg.mxu0
        %1349 = vmatprep.subr.bf16.mxu0 %v1093
        %1350 = vmatpush1.bf16.msra.mxu0 %v1092
        %1351 = vmatprep.subr.bf16.mxu0 %v1090
        %1352 = vmatpush1.bf16.msra.mxu0 %v1089
        %1353 = vmatprep.subr.bf16.mxu0 %v1087
        %1354 = vmatpush1.bf16.msra.mxu0 %v1086
        %1355 = vmatprep.subr.bf16.mxu0 %v1084
        %1356 = vmatpush1.bf16.msra.mxu0 %v1083
        %1357 = vmatprep.subr.bf16.mxu0 %v1081
        %1358 = vmatpush1.bf16.msra.mxu0 %v1080
        %1359 = vmatprep.subr.bf16.mxu0 %v1078
        %1360 = vmatpush1.bf16.msra.mxu0 %v1077
        %1361 = vmatprep.subr.bf16.mxu0 %v1075
        %1362 = vmatpush1.bf16.msra.mxu0 %v1074
        %1363 = vmatprep.subr.bf16.mxu0 %v1072
        %1364 = vmatpush1.bf16.msra.mxu0 %v1071
        %1365 = vmatprep.subr.bf16.mxu0 %v1117
        %1366 = vmatpush2.bf16.msra.mxu0 %v1116
        %1367 = vmatprep.subr.bf16.mxu0 %v1114
        %1368 = vmatpush2.bf16.msra.mxu0 %v1113
        %1369 = vmatprep.subr.bf16.mxu0 %v1111
        %1370 = vmatpush2.bf16.msra.mxu0 %v1110
        %1371 = vmatprep.subr.bf16.mxu0 %v1108
        %1372 = vmatpush2.bf16.msra.mxu0 %v1107
        %1373 = vmatprep.subr.bf16.mxu0 %v1105
        %1374 = vmatpush2.bf16.msra.mxu0 %v1104
        %1375 = vmatprep.subr.bf16.mxu0 %v1102
        %1376 = vmatpush2.bf16.msra.mxu0 %v1101
        %1377 = vmatprep.subr.bf16.mxu0 %v1099
        %1378 = vmatpush2.bf16.msra.mxu0 %v1098
        %1379 = vmatprep.subr.bf16.mxu0 %v1096
        %1380 = vmatpush2.bf16.msra.mxu0 %v1095
        %1381 = vmatprep.mubr.bf16.mxu0 %v285
        %1382 = vmatmul.mubr.bf16.gmra.mxu0 %v284
        %v1383 = vpop.f32.mrf.mxu0
        %v1384 = vadd.f32 %v1341, %v1383
        %v1385 = vpop.f32.mrf.mxu0
        %v1386 = vadd.f32 %v1343, %v1385
        %v1387 = vpop.f32.mrf.mxu0
        %v1388 = vadd.f32 %v1345, %v1387
        %v1389 = vpop.f32.mrf.mxu0
        %v1390 = vadd.f32 %v1347, %v1389
        %1391 = vdwg.mxu0
        %1392 = vmatprep.subr.bf16.mxu0 0
        %1393 = vmatpush1.bf16.msra.mxu0 %v998
        %1394 = vmatprep.subr.bf16.mxu0 0
        %1395 = vmatpush1.bf16.msra.mxu0 %v995
        %1396 = vmatprep.subr.bf16.mxu0 0
        %1397 = vmatpush1.bf16.msra.mxu0 %v992
        %1398 = vmatprep.subr.bf16.mxu0 0
        %1399 = vmatpush1.bf16.msra.mxu0 %v989
        %1400 = vmatprep.subr.bf16.mxu0 0
        %1401 = vmatpush1.bf16.msra.mxu0 %v986
        %1402 = vmatprep.subr.bf16.mxu0 0
        %1403 = vmatpush1.bf16.msra.mxu0 %v983
        %1404 = vmatprep.subr.bf16.mxu0 0
        %1405 = vmatpush1.bf16.msra.mxu0 %v980
        %1406 = vmatprep.subr.bf16.mxu0 0
        %1407 = vmatpush1.bf16.msra.mxu0 %v977
        %1408 = vmatprep.subr.bf16.mxu0 0
        %1409 = vmatpush2.bf16.msra.mxu0 %v1022
        %1410 = vmatprep.subr.bf16.mxu0 0
        %1411 = vmatpush2.bf16.msra.mxu0 %v1019
        %1412 = vmatprep.subr.bf16.mxu0 0
        %1413 = vmatpush2.bf16.msra.mxu0 %v1016
        %1414 = vmatprep.subr.bf16.mxu0 0
        %1415 = vmatpush2.bf16.msra.mxu0 %v1013
        %1416 = vmatprep.subr.bf16.mxu0 0
        %1417 = vmatpush2.bf16.msra.mxu0 %v1010
        %1418 = vmatprep.subr.bf16.mxu0 0
        %1419 = vmatpush2.bf16.msra.mxu0 %v1007
        %1420 = vmatprep.subr.bf16.mxu0 0
        %1421 = vmatpush2.bf16.msra.mxu0 %v1004
        %1422 = vmatprep.subr.bf16.mxu0 0
        %1423 = vmatpush2.bf16.msra.mxu0 %v1001
        %1424 = vmatprep.mubr.bf16.mxu0 %v281
        %1425 = vmatmul.mubr.bf16.gmra.mxu0 %v280
        %v1426 = vpop.f32.mrf.mxu0
        %v1427 = vadd.f32 %v491, %v1426
        %v1428 = vpop.f32.mrf.mxu0
        %v1429 = vpop.f32.mrf.mxu0
        %v1430 = vadd.f32 %v491, %v1429
        %v1431 = vpop.f32.mrf.mxu0
        %1432 = vdwg.mxu0
        %1433 = vmatprep.subr.bf16.mxu0 0
        %1434 = vmatpush1.bf16.msra.mxu0 %v1046
        %1435 = vmatprep.subr.bf16.mxu0 0
        %1436 = vmatpush1.bf16.msra.mxu0 %v1043
        %1437 = vmatprep.subr.bf16.mxu0 0
        %1438 = vmatpush1.bf16.msra.mxu0 %v1040
        %1439 = vmatprep.subr.bf16.mxu0 0
        %1440 = vmatpush1.bf16.msra.mxu0 %v1037
        %1441 = vmatprep.subr.bf16.mxu0 0
        %1442 = vmatpush1.bf16.msra.mxu0 %v1034
        %1443 = vmatprep.subr.bf16.mxu0 0
        %1444 = vmatpush1.bf16.msra.mxu0 %v1031
        %1445 = vmatprep.subr.bf16.mxu0 0
        %1446 = vmatpush1.bf16.msra.mxu0 %v1028
        %1447 = vmatprep.subr.bf16.mxu0 0
        %1448 = vmatpush1.bf16.msra.mxu0 %v1025
        %1449 = vmatprep.subr.bf16.mxu0 0
        %1450 = vmatpush2.bf16.msra.mxu0 %v1070
        %1451 = vmatprep.subr.bf16.mxu0 0
        %1452 = vmatpush2.bf16.msra.mxu0 %v1067
        %1453 = vmatprep.subr.bf16.mxu0 0
        %1454 = vmatpush2.bf16.msra.mxu0 %v1064
        %1455 = vmatprep.subr.bf16.mxu0 0
        %1456 = vmatpush2.bf16.msra.mxu0 %v1061
        %1457 = vmatprep.subr.bf16.mxu0 0
        %1458 = vmatpush2.bf16.msra.mxu0 %v1058
        %1459 = vmatprep.subr.bf16.mxu0 0
        %1460 = vmatpush2.bf16.msra.mxu0 %v1055
        %1461 = vmatprep.subr.bf16.mxu0 0
        %1462 = vmatpush2.bf16.msra.mxu0 %v1052
        %1463 = vmatprep.subr.bf16.mxu0 0
        %1464 = vmatpush2.bf16.msra.mxu0 %v1049
        %1465 = vmatprep.mubr.bf16.mxu0 %v283
        %1466 = vmatmul.mubr.bf16.gmra.mxu0 %v282
        %v1467 = vpop.f32.mrf.mxu0
        %v1468 = vadd.f32 %v1427, %v1467
        %v1469 = vpop.f32.mrf.mxu0
        %v1470 = vpop.f32.mrf.mxu0
        %v1471 = vadd.f32 %v1430, %v1470
        %v1472 = vpop.f32.mrf.mxu0
        %1473 = vdwg.mxu0
        %1474 = vmatprep.subr.bf16.mxu0 0
        %1475 = vmatpush1.bf16.msra.mxu0 %v1094
        %1476 = vmatprep.subr.bf16.mxu0 0
        %1477 = vmatpush1.bf16.msra.mxu0 %v1091
        %1478 = vmatprep.subr.bf16.mxu0 0
        %1479 = vmatpush1.bf16.msra.mxu0 %v1088
        %1480 = vmatprep.subr.bf16.mxu0 0
        %1481 = vmatpush1.bf16.msra.mxu0 %v1085
        %1482 = vmatprep.subr.bf16.mxu0 0
        %1483 = vmatpush1.bf16.msra.mxu0 %v1082
        %1484 = vmatprep.subr.bf16.mxu0 0
        %1485 = vmatpush1.bf16.msra.mxu0 %v1079
        %1486 = vmatprep.subr.bf16.mxu0 0
        %1487 = vmatpush1.bf16.msra.mxu0 %v1076
        %1488 = vmatprep.subr.bf16.mxu0 0
        %1489 = vmatpush1.bf16.msra.mxu0 %v1073
        %1490 = vmatprep.subr.bf16.mxu0 0
        %1491 = vmatpush2.bf16.msra.mxu0 %v1118
        %1492 = vmatprep.subr.bf16.mxu0 0
        %1493 = vmatpush2.bf16.msra.mxu0 %v1115
        %1494 = vmatprep.subr.bf16.mxu0 0
        %1495 = vmatpush2.bf16.msra.mxu0 %v1112
        %1496 = vmatprep.subr.bf16.mxu0 0
        %1497 = vmatpush2.bf16.msra.mxu0 %v1109
        %1498 = vmatprep.subr.bf16.mxu0 0
        %1499 = vmatpush2.bf16.msra.mxu0 %v1106
        %1500 = vmatprep.subr.bf16.mxu0 0
        %1501 = vmatpush2.bf16.msra.mxu0 %v1103
        %1502 = vmatprep.subr.bf16.mxu0 0
        %1503 = vmatpush2.bf16.msra.mxu0 %v1100
        %1504 = vmatprep.subr.bf16.mxu0 0
        %1505 = vmatpush2.bf16.msra.mxu0 %v1097
        %1506 = vmatprep.mubr.bf16.mxu0 %v285
        %1507 = vmatmul.mubr.bf16.gmra.mxu0 %v284
        %v1508 = vpop.f32.mrf.mxu0
        %v1509 = vadd.f32 %v1468, %v1508
        %v1510 = vpop.f32.mrf.mxu0
        %v1511 = vpop.f32.mrf.mxu0
        %v1512 = vadd.f32 %v1471, %v1511
        %v1513 = vpop.f32.mrf.mxu0
        %1514 = vdwg.mxu0
        %1515 = vst [vmem:[%s261] sm:$0xff] %v1384
        %1516 = vst [vmem:[%s261 + $0x8] sm:$0xff] %v1386
        %1517 = vst [vmem:[%s261 + $0x10] sm:$0xff] %v1509
        %1518 = vst [vmem:[%s261 + $0x18] sm:$0xff] %v1388
        %1519 = vst [vmem:[%s261 + $0x20] sm:$0xff] %v1390
        %1520 = vst [vmem:[%s261 + $0x28] sm:$0xff] %v1512
        %s1521 = sand.u32 %s121, 1
        %s1522 = scalar_lea.sflag [#allocation4], %s1521
        %s1523 = sand.u32 %s121, 1
        %s1524 = smul.addr %s1523, 48
        %s1525 = scalar_lea.vmem [#allocation8], %s1524
        // Predicated region
        $region45: #{tpu_custom_call.1} parent=31 // pred_check
          %p1526 = pneg %p131
        $region46: #{tpu_custom_call.1} parent=31 // pred_check_branch
          %1528 = sbr.rel (%p1526) target = $region48
        $region47: #{tpu_custom_call.1} parent=31 // pred_region
          %s1529 = smul.u32 2, %s26
          %s1530 = smul.u32 3, %s25
          %s1532 = ssub.s32 768, 768
          %1533 = vsyncadd %s1522, %s1532
          %s1534 = smul.addr %s1529, 6
          %s1535 = sadd.s32 %s1530, %s1534
          %s1536 = smul.addr %s1535, 128
          %s1537 = scalar_lea.hbm %s3, %s1536
          %s1538 = sshll.u32 %s1525, 4
          %s1539 = int_to_ptr.vmem [resolvable:$true] %s1538
          %1544 = dma.vmem_to_hbm [thread:$0]  %s1539, 768, %s1537, %s1522, 384, 768, 24
        $region48: #{tpu_custom_call.1} parent=31 // pred_fallthru
          _
      $region32: #{tpu_custom_call.1} parent=5 // pred_fallthru
        _
      %p1545 = scmp.le.s32.totalorder 2, %s16
      // Predicated region
      $region49: #{tpu_custom_call.1} parent=5 // pred_check
        %p1546 = pneg %p1545
      $region50: #{tpu_custom_call.1} parent=5 // pred_check_branch
        %1548 = sbr.rel (%p1546) target = $region52
      $region51: #{tpu_custom_call.1} parent=5 // pred_region
        %s1549 = ssub.s32 %s16, 2
        // Predicated region
        $region53: #{tpu_custom_call.1} parent=51 // pred_check
          %p1550 = pneg %p137
        $region54: #{tpu_custom_call.1} parent=51 // pred_check_branch
          %1552 = sbr.rel (%p1550) target = $region56
        $region55: #{tpu_custom_call.1} parent=51 // pred_region
          %s1553 = sand.u32 %s122, 1
          %s1554 = scalar_lea.sflag [#allocation4], %s1553
          %s1555 = sand.u32 %s122, 1
          %s1556 = smul.addr %s1555, 48
          %s1557 = scalar_lea.vmem [#allocation8], %s1556
          %1558 = dma.done %s1554, 768
        $region56: #{tpu_custom_call.1} parent=51 // pred_fallthru
          _
      $region52: #{tpu_custom_call.1} parent=5 // pred_fallthru
        _
    $region6: #{tpu_custom_call.1} parent=1 // loop_footer
      %s20 = sadd.s32 1, %s16
    $region7: #{tpu_custom_call.1} parent=1 // loop_footer_branch
      %15 = sbr.rel target = $region3
    $region8: #{tpu_custom_call.1} parent=1 // loop_exit
      _
    %1559 = vsyncpa [#allocation3], 1
    %s1560 = scalar_lea.sflag [#allocation3], 1
    %1561 = vsyncpa %s1560, 1
    %1562 = vsyncpa [#allocation6], 1
    %s1563 = scalar_lea.sflag [#allocation6], 1
    %1564 = vsyncpa %s1563, 1
    %1565 = vsyncpa [#allocation4], 1
    %s1566 = scalar_lea.sflag [#allocation4], 1
    %1567 = vsyncpa %s1566, 1

</llo_original>
